<compile_context>
chip_gen: v6e
topology: v6e:2x2x1
jax: 0.10.0
libtpu: 0.0.40
codegen_flags: <defaults>
</compile_context>

<pallas_src>
import jax
import jax.numpy as jnp
from jax.experimental import pallas as pl
from jax.experimental.pallas import tpu as pltpu


def _round_up(n: int, m: int) -> int:
    return ((n + m - 1) // m) * m


def pack_params(w1, b1, w2, b2, w3, b3, dtype):
    """Pack torch-layout weights/biases into one lane-aligned VMEM slab.

    Layout (rows = H = 32, lane-aligned column sections):
      cols [0, D)              : W1  (H, D)
      cols [Dp, Dp+H)          : W2  (H, H)
      cols [Dp+128, Dp+128+H)  : W3 padded to (H, H) (rows >= C are zero)
      col   Dp+256             : b1
      col   Dp+257             : b2
      col   Dp+258             : b3 padded (rows >= C are zero)
    where Dp = round_up(D, 128).
    """
    H, D = w1.shape
    C = w3.shape[0]
    Dp = _round_up(D, 128)
    cols = Dp + 3 * 128
    slab = jnp.zeros((H, cols), dtype)
    slab = slab.at[:, :D].set(w1.astype(dtype))
    slab = slab.at[:, Dp:Dp + H].set(w2.astype(dtype))
    slab = slab.at[:C, Dp + 128:Dp + 128 + H].set(w3.astype(dtype))
    slab = slab.at[:, Dp + 256].set(b1.astype(dtype))
    slab = slab.at[:, Dp + 257].set(b2.astype(dtype))
    slab = slab.at[:C, Dp + 258].set(b3.astype(dtype))
    return slab


def _make_kernel(D, Dp, H, C, compute_dtype):
    c_w2 = Dp
    c_w3 = Dp + 128
    c_b = Dp + 256

    def kernel(xt_ref, slab_ref, o_ref):
        # xt_ref: (D, TILE_B) streamed per grid step; slab_ref: resident params.
        xt = xt_ref[...]                                  # (D, TB) compute_dtype
        w1 = slab_ref[:, 0:D]                             # (H, D)
        w2 = slab_ref[:, c_w2:c_w2 + H]                   # (H, H)
        w3 = slab_ref[:, c_w3:c_w3 + H]                   # (H, H), rows >= C zero
        b1 = slab_ref[:, c_b + 0:c_b + 1]                 # (H, 1)
        b2 = slab_ref[:, c_b + 1:c_b + 2]                 # (H, 1)
        b3 = slab_ref[:, c_b + 2:c_b + 3]                 # (H, 1), rows >= C zero

        # fc1 + ReLU   (MXU dot, f32 accumulation; lane axis = batch)
        h = jnp.dot(w1, xt, preferred_element_type=jnp.float32) + b1
        h = jnp.maximum(h, 0.0)
        # dropout(p=0.25): identity in eval mode
        # fc2 + ReLU
        h = jnp.dot(w2, h.astype(compute_dtype), preferred_element_type=jnp.float32) + b2
        h = jnp.maximum(h, 0.0)
        # dropout(p=0.25): identity in eval mode
        # fc3
        out = jnp.dot(w3, h.astype(compute_dtype), preferred_element_type=jnp.float32) + b3
        o_ref[...] = out[:C, :].astype(o_ref.dtype)       # (C, TB) lane-dense store

    return kernel


def net_forward(x, w1, b1, w2, b2, w3, b3, *, tile_b=512, compute_dtype=jnp.float32):
    """Forward pass of Net.  x: (B, D) f32; weights in torch (out, in) layout."""
    B, D = x.shape
    H = w1.shape[0]
    C = w3.shape[0]
    assert w2.shape == (H, H) and w3.shape == (C, H)
    assert b1.shape == (H,) and b2.shape == (H,) and b3.shape == (C,)

    # Batch tile: multiple of 128 (lane width); shrink for small batches.
    b_aligned = _round_up(max(B, 1), 128)
    tb = min(_round_up(tile_b, 128), b_aligned)
    b_pad = _round_up(B, tb)
    n_tiles = b_pad // tb

    Dp = _round_up(D, 128)
    slab = pack_params(w1, b1, w2, b2, w3, b3, compute_dtype)
    slab_cols = slab.shape[1]

    # Feature-major (transposed, zero-padded) activations: batch on the lane axis.
    xt = jnp.zeros((D, b_pad), compute_dtype).at[:, :B].set(x.astype(compute_dtype).T)

    itemsize = jnp.dtype(compute_dtype).itemsize
    cost = pl.CostEstimate(
        flops=2 * b_pad * (D * H + H * H + H * C),
        transcendentals=0,
        bytes_accessed=D * b_pad * itemsize + H * slab_cols * itemsize + C * b_pad * 4,
    )

    kernel = _make_kernel(D, Dp, H, C, compute_dtype)
    out_t = pl.pallas_call(
        kernel,
        out_shape=jax.ShapeDtypeStruct((C, b_pad), jnp.float32),
        grid=(n_tiles,),
        in_specs=[
            pl.BlockSpec((D, tb), lambda i: (0, i)),            # x tile streams per step
            pl.BlockSpec((H, slab_cols), lambda i: (0, 0)),     # params: constant -> resident
        ],
        out_specs=pl.BlockSpec((C, tb), lambda i: (0, i)),
        compiler_params=pltpu.CompilerParams(
            dimension_semantics=("parallel",),                  # dual-TC on v7x; no-op on v5e/v6e
        ),
        cost_estimate=cost,
    )(xt, slab)

    return out_t[:, :B].T                                       # back to (B, C)


def init_params(key, d_in, h1=32, h2=32, n_classes=3):
    """Torch nn.Linear-style init, weights in torch (out, in) layout."""
    ks = jax.random.split(key, 6)

    def lin(kw, kb, fan_in, fan_out):
        bound = 1.0 / float(fan_in) ** 0.5
        w = jax.random.uniform(kw, (fan_out, fan_in), jnp.float32, -bound, bound)
        b = jax.random.uniform(kb, (fan_out,), jnp.float32, -bound, bound)
        return w, b

    w1, b1 = lin(ks[0], ks[1], d_in, h1)
    w2, b2 = lin(ks[2], ks[3], h1, h2)
    w3, b3 = lin(ks[4], ks[5], h2, n_classes)
    return w1, b1, w2, b2, w3, b3


def reference(x, w1, b1, w2, b2, w3, b3):
    h = jnp.maximum(x @ w1.T + b1, 0.0)
    h = jnp.maximum(h @ w2.T + b2, 0.0)
    return h @ w3.T + b3


if __name__ == "__main__":
    key = jax.random.PRNGKey(0)
    k_x, k_p, k_x2 = jax.random.split(key, 3)

    B = 8      # small batch of gene-expression samples
    D = 64     # number of features = train.shape[1] - 1 (synthetic choice)

    x = jax.random.normal(k_x, (B, D), dtype=jnp.float32)
    params = init_params(k_p, D)

    # f32 path, single tile (tile shrinks to 128 for the tiny batch)
    out = jax.block_until_ready(net_forward(x, *params))
    ref = reference(x, *params)
    assert out.shape == (B, 3)
    assert jnp.allclose(out, ref, atol=1e-5, rtol=1e-5)

    # Multi-step grid + ragged tail (B=300 with TILE_B=128 -> 3 grid steps, padded tail)
    B2 = 300
    x2 = jax.random.normal(k_x2, (B2, D), dtype=jnp.float32)
    out2 = jax.block_until_ready(net_forward(x2, *params, tile_b=128))
    ref2 = reference(x2, *params)
    assert out2.shape == (B2, 3)
    assert jnp.allclose(out2, ref2, atol=1e-5, rtol=1e-5)

    # bf16 compute path (v6e/v7x HBM-traffic optimization), f32 MXU accumulation
    out_bf16 = jax.block_until_ready(
        net_forward(x2, *params, tile_b=128, compute_dtype=jnp.bfloat16))
    assert out_bf16.shape == (B2, 3)
    assert jnp.allclose(out_bf16, ref2, atol=5e-2, rtol=5e-2)

    print("KERNEL_OK")
</pallas_src>

<mosaic_0001>
module attributes {stable_mosaic.version = 11 : i64} {
  func.func @kernel(%arg0: i32, %arg1: memref<64x128xf32, #tpu.memory_space<vmem>>, %arg2: memref<32x512xf32, #tpu.memory_space<vmem>>, %arg3: memref<3x128xf32, #tpu.memory_space<vmem>>) attributes {dimension_semantics = [#tpu.dimension_semantics<parallel>], iteration_bounds = array<i64: 1>, scalar_prefetch = 0 : i64, scratch_operands = 0 : i64, tpu.core_type = #tpu.core_type<tc>, window_params = [{transform_indices = @transform_0, window_bounds = array<i64: 64, 128>}, {pipeline_mode = #tpu.pipeline_mode<synchronous>, transform_indices = @transform_1, window_bounds = array<i64: 32, 512>}, {transform_indices = @transform_2, window_bounds = array<i64: 3, 128>}]} {
    %c0 = arith.constant 0 : index
    %c0_0 = arith.constant 0 : index
    %0 = vector.load %arg1[%c0, %c0_0] : memref<64x128xf32, #tpu.memory_space<vmem>>, vector<64x128xf32>
    %c0_1 = arith.constant 0 : index
    %c0_2 = arith.constant 0 : index
    %1 = vector.load %arg2[%c0_1, %c0_2] : memref<32x512xf32, #tpu.memory_space<vmem>>, vector<32x64xf32>
    %c0_3 = arith.constant 0 : index
    %c128 = arith.constant 128 : index
    %2 = vector.load %arg2[%c0_3, %c128] : memref<32x512xf32, #tpu.memory_space<vmem>>, vector<32x32xf32>
    %c0_4 = arith.constant 0 : index
    %c256 = arith.constant 256 : index
    %3 = vector.load %arg2[%c0_4, %c256] : memref<32x512xf32, #tpu.memory_space<vmem>>, vector<32x32xf32>
    %c0_5 = arith.constant 0 : index
    %c384 = arith.constant 384 : index
    %4 = vector.load %arg2[%c0_5, %c384] : memref<32x512xf32, #tpu.memory_space<vmem>>, vector<32x1xf32>
    %c0_6 = arith.constant 0 : index
    %c385 = arith.constant 385 : index
    %5 = vector.load %arg2[%c0_6, %c385] : memref<32x512xf32, #tpu.memory_space<vmem>>, vector<32x1xf32>
    %c0_7 = arith.constant 0 : index
    %c386 = arith.constant 386 : index
    %6 = vector.load %arg2[%c0_7, %c386] : memref<32x512xf32, #tpu.memory_space<vmem>>, vector<32x1xf32>
    %cst = arith.constant dense<0.000000e+00> : vector<32x128xf32>
    %7 = tpu.matmul %1, %0, %cst {dimension_numbers = #tpu.dot_dimension_numbers<[1], [0], [0], [1], [0, 0, 1, 1], [], []>} : vector<32x64xf32>, vector<64x128xf32>, vector<32x128xf32> -> vector<32x128xf32>
    %8 = vector.broadcast %4 : vector<32x1xf32> to vector<32x128xf32>
    %9 = arith.addf %7, %8 : vector<32x128xf32>
    %cst_8 = arith.constant 0.000000e+00 : f32
    %10 = vector.broadcast %cst_8 : f32 to vector<32x128xf32>
    %11 = arith.maximumf %9, %10 : vector<32x128xf32>
    %cst_9 = arith.constant dense<0.000000e+00> : vector<32x128xf32>
    %12 = tpu.matmul %2, %11, %cst_9 {dimension_numbers = #tpu.dot_dimension_numbers<[1], [0], [0], [1], [0, 0, 1, 1], [], []>} : vector<32x32xf32>, vector<32x128xf32>, vector<32x128xf32> -> vector<32x128xf32>
    %13 = vector.broadcast %5 : vector<32x1xf32> to vector<32x128xf32>
    %14 = arith.addf %12, %13 : vector<32x128xf32>
    %cst_10 = arith.constant 0.000000e+00 : f32
    %15 = vector.broadcast %cst_10 : f32 to vector<32x128xf32>
    %16 = arith.maximumf %14, %15 : vector<32x128xf32>
    %cst_11 = arith.constant dense<0.000000e+00> : vector<32x128xf32>
    %17 = tpu.matmul %3, %16, %cst_11 {dimension_numbers = #tpu.dot_dimension_numbers<[1], [0], [0], [1], [0, 0, 1, 1], [], []>} : vector<32x32xf32>, vector<32x128xf32>, vector<32x128xf32> -> vector<32x128xf32>
    %18 = vector.broadcast %6 : vector<32x1xf32> to vector<32x128xf32>
    %19 = arith.addf %17, %18 : vector<32x128xf32>
    %20 = vector.extract_strided_slice %19 {offsets = [0, 0], sizes = [3, 128], strides = [1, 1]} : vector<32x128xf32> to vector<3x128xf32>
    %c0_12 = arith.constant 0 : index
    %c0_13 = arith.constant 0 : index
    %21 = vector.load %arg3[%c0_12, %c0_13] : memref<3x128xf32, #tpu.memory_space<vmem>>, vector<3x128xf32>
    tpu.vector_store %arg3[%c0_12, %c0_13], %20 {strides = array<i32>} : memref<3x128xf32, #tpu.memory_space<vmem>>, vector<3x128xf32>,
    return
  }
  func.func @transform_0(%arg0: i32) -> (i32, i32) {
    %c0_i32 = arith.constant 0 : i32
    %c0_i32_0 = arith.constant 0 : i32
    return %c0_i32, %arg0 : i32, i32
  }
  func.func @transform_1(%arg0: i32) -> (i32, i32) {
    %c0_i32 = arith.constant 0 : i32
    %c0_i32_0 = arith.constant 0 : i32
    %c0_i32_1 = arith.constant 0 : i32
    return %c0_i32, %c0_i32_0 : i32, i32
  }
  func.func @transform_2(%arg0: i32) -> (i32, i32) {
    %c0_i32 = arith.constant 0 : i32
    %c0_i32_0 = arith.constant 0 : i32
    return %c0_i32, %arg0 : i32, i32
  }
}

</mosaic_0001>

<llo_original>
// kernel: tpu_custom_call.1
$region0: #{tpu_custom_call.1}
  #allocation0 [shape = 'u32[]', space=smem, size = 0x4, offset = 0x4, fixed_abs, tag = 'smem constant byte address 0x4 - core index']
  #allocation1 [shape = 'u32[144,128]{1,0:T(1,128)}', space=vmem, size = 0x12000, scoped, tag = 'internal scratch']
  %s0 = inlined_call_operand.hbm [shape: f32[64,128], index: 0, kind: input, shape index: {}]
  %s1 = inlined_call_operand.hbm [shape: f32[32,512], index: 1, kind: input, shape index: {}]
  %s2 = inlined_call_operand.hbm [shape: f32[3,128], index: 2, kind: output, shape index: {}]
  %s3 = sld [smem:[#allocation0]]
  $region26: #{tpu_custom_call.1} parent=0
    _
  %s5 = ssub.s32 1, %s3
  %s6 = scalar_select 0, %s5, %s3
  $region1: #{tpu_custom_call.1} parent=0
    #allocation2 [shape = 'u8[32768]{0}', space=vmem, size = 0x8000, scoped, tag = 'input window, operand 0, single buffered']
    #allocation3 [shape = 's32[1]{0}', space=sflag, size = 0x4, scoped, tag = 'scoped memory for tpu_custom_call.1']
    #allocation4 [shape = 's32[1]{0}', space=sflag, size = 0x4, scoped, tag = 'scoped memory for tpu_custom_call.1']
    #allocation5 [shape = 'u8[65536]{0}', space=vmem, size = 0x10000, scoped, tag = 'input window, operand 1, single buffered']
    #allocation6 [shape = 's32[1]{0}', space=sflag, size = 0x4, scoped, tag = 'scoped memory for tpu_custom_call.1']
    #allocation7 [shape = 'u8[2048]{0}', space=vmem, size = 0x800, scoped, tag = 'output window, operand 0, single buffered']
    %7 = vsyncpa [#allocation3], 0
    %8 = vsyncpa [#allocation6], 0
    %9 = vsyncpa [#allocation4], 0
    // Predicated region
    $region2: #{tpu_custom_call.1} parent=1 // pred_check
      _
    $region3: #{tpu_custom_call.1} parent=1 // pred_check_branch
      %11 = sbr.rel (0) target = $region5
    $region4: #{tpu_custom_call.1} parent=1 // pred_region
      %s13 = ssub.s32 1024, 1024
      %14 = vsyncadd [#allocation3], %s13
      %s15 = sshll.u32 [#allocation2], 4
      %s16 = int_to_ptr.vmem [resolvable:$true] %s15
      %21 = dma.hbm_to_vmem [thread:$0]  %s0, 1024, %s16, [#allocation3], 128, 128, 8
    $region5: #{tpu_custom_call.1} parent=1 // pred_fallthru
      _
    // Predicated region
    $region6: #{tpu_custom_call.1} parent=1 // pred_check
      _
    $region7: #{tpu_custom_call.1} parent=1 // pred_check_branch
      %23 = sbr.rel (0) target = $region9
    $region8: #{tpu_custom_call.1} parent=1 // pred_region
      %s25 = ssub.s32 2048, 2048
      %26 = vsyncadd [#allocation6], %s25
      %s27 = sshll.u32 [#allocation5], 4
      %s28 = int_to_ptr.vmem [resolvable:$true] %s27
      %33 = dma.hbm_to_vmem [thread:$0]  %s1, 2048, %s28, [#allocation6], 512, 512, 32
    $region9: #{tpu_custom_call.1} parent=1 // pred_fallthru
      _
    // Predicated region
    $region10: #{tpu_custom_call.1} parent=1 // pred_check
      _
    $region11: #{tpu_custom_call.1} parent=1 // pred_check_branch
      %35 = sbr.rel (0) target = $region13
    $region12: #{tpu_custom_call.1} parent=1 // pred_region
      %36 = dma.done [#allocation3], 1024
    $region13: #{tpu_custom_call.1} parent=1 // pred_fallthru
      _
    // Predicated region
    $region14: #{tpu_custom_call.1} parent=1 // pred_check
      _
    $region15: #{tpu_custom_call.1} parent=1 // pred_check_branch
      %38 = sbr.rel (0) target = $region17
    $region16: #{tpu_custom_call.1} parent=1 // pred_region
      %39 = dma.done [#allocation6], 2048
    $region17: #{tpu_custom_call.1} parent=1 // pred_fallthru
      _
    %v40 = vld [vmem:[#allocation2] sm:$0xff]
    %v41 = vld [vmem:[#allocation2 + $0x8] sm:$0xff]
    %v42 = vld [vmem:[#allocation2 + $0x10] sm:$0xff]
    %v43 = vld [vmem:[#allocation2 + $0x18] sm:$0xff]
    %v44 = vld [vmem:[#allocation2 + $0x20] sm:$0xff]
    %v45 = vld [vmem:[#allocation2 + $0x28] sm:$0xff]
    %v46 = vld [vmem:[#allocation2 + $0x30] sm:$0xff]
    %v47 = vld [vmem:[#allocation2 + $0x38] sm:$0xff]
    %v48 = vld [vmem:[#allocation5] sm:$0xff]
    %v49 = vld [vmem:[#allocation5 + $0x20] sm:$0xff]
    %v50 = vld [vmem:[#allocation5 + $0x40] sm:$0xff]
    %v51 = vld [vmem:[#allocation5 + $0x60] sm:$0xff]
    %v52 = vld [vmem:[#allocation5 + $0x8] sm:$0xff]
    %v53 = vld [vmem:[#allocation5 + $0x28] sm:$0xff]
    %v54 = vld [vmem:[#allocation5 + $0x48] sm:$0xff]
    %v55 = vld [vmem:[#allocation5 + $0x68] sm:$0xff]
    %v56 = vld [vmem:[#allocation5 + $0x10] sm:$0xff]
    %v57 = vld [vmem:[#allocation5 + $0x30] sm:$0xff]
    %v58 = vld [vmem:[#allocation5 + $0x50] sm:$0xff]
    %v59 = vld [vmem:[#allocation5 + $0x70] sm:$0xff]
    %v60 = vld [vmem:[#allocation5 + $0x18] sm:$0xff]
    %v61 = vld [vmem:[#allocation5 + $0x38] sm:$0xff]
    %v62 = vld [vmem:[#allocation5 + $0x58] sm:$0xff]
    %v63 = vld [vmem:[#allocation5 + $0x78] sm:$0xff]
    %65 = vset.pattern.permute.xlu0 0
    %66 = vperm.xlu0 %65, %v60
    %v67 = vpop.permute.xlu0 %66
    %70 = vset.pattern.permute.xlu0 0
    %71 = vperm.xlu0 %70, %v61
    %v72 = vpop.permute.xlu0 %71
    %75 = vset.pattern.permute.xlu0 0
    %76 = vperm.xlu0 %75, %v62
    %v77 = vpop.permute.xlu0 %76
    %80 = vset.pattern.permute.xlu0 0
    %81 = vperm.xlu0 %80, %v63
    %v82 = vpop.permute.xlu0 %81
    %vm84 = vcmask 523264
    %v86 = vsel %vm84, %v48, 0
    %v89 = vsel %vm84, %v49, 0
    %v92 = vsel %vm84, %v50, 0
    %v95 = vsel %vm84, %v51, 0
    %97 = vmatprep.subr.mxu0 0.0
    %98 = vmatpush1.msra.mxu0 0.0
    %99 = vmatprep.subr.mxu0 0.0
    %100 = vmatpush1.msra.mxu0 0.0
    %101 = vmatprep.subr.mxu0 0.0
    %102 = vmatpush1.msra.mxu0 0.0
    %103 = vmatprep.subr.mxu0 0.0
    %104 = vmatpush1.msra.mxu0 0.0
    %105 = vmatprep.subr.mxu0 0.0
    %106 = vmatpush1.msra.mxu0 0.0
    %107 = vmatprep.subr.mxu0 0.0
    %108 = vmatpush1.msra.mxu0 0.0
    %109 = vmatprep.subr.mxu0 0.0
    %110 = vmatpush1.msra.mxu0 0.0
    %111 = vmatprep.subr.mxu0 0.0
    %112 = vmatpush1.msra.mxu0 0.0
    %113 = vmatprep.subr.mxu0 0.0
    %114 = vmatpush1.msra.mxu0 %v47
    %115 = vmatprep.subr.mxu0 0.0
    %116 = vmatpush1.msra.mxu0 %v46
    %117 = vmatprep.subr.mxu0 0.0
    %118 = vmatpush1.msra.mxu0 %v45
    %119 = vmatprep.subr.mxu0 0.0
    %120 = vmatpush1.msra.mxu0 %v44
    %121 = vmatprep.subr.mxu0 0.0
    %122 = vmatpush1.msra.mxu0 %v43
    %123 = vmatprep.subr.mxu0 0.0
    %124 = vmatpush1.msra.mxu0 %v42
    %125 = vmatprep.subr.mxu0 0.0
    %126 = vmatpush1.msra.mxu0 %v41
    %127 = vmatprep.subr.mxu0 0.0
    %128 = vmatpush1.msra.mxu0 %v40
    %129 = vmatprep.subr.mxu0 0.0
    %130 = vmatpush2.msra.mxu0 0.0
    %131 = vmatprep.subr.mxu0 0.0
    %132 = vmatpush2.msra.mxu0 0.0
    %133 = vmatprep.subr.mxu0 0.0
    %134 = vmatpush2.msra.mxu0 0.0
    %135 = vmatprep.subr.mxu0 0.0
    %136 = vmatpush2.msra.mxu0 0.0
    %137 = vmatprep.subr.mxu0 0.0
    %138 = vmatpush2.msra.mxu0 0.0
    %139 = vmatprep.subr.mxu0 0.0
    %140 = vmatpush2.msra.mxu0 0.0
    %141 = vmatprep.subr.mxu0 0.0
    %142 = vmatpush2.msra.mxu0 0.0
    %143 = vmatprep.subr.mxu0 0.0
    %144 = vmatpush2.msra.mxu0 0.0
    %145 = vmatprep.subr.mxu0 0.0
    %146 = vmatpush2.msra.mxu0 0.0
    %147 = vmatprep.subr.mxu0 0.0
    %148 = vmatpush2.msra.mxu0 0.0
    %149 = vmatprep.subr.mxu0 0.0
    %150 = vmatpush2.msra.mxu0 0.0
    %151 = vmatprep.subr.mxu0 0.0
    %152 = vmatpush2.msra.mxu0 0.0
    %153 = vmatprep.subr.mxu0 0.0
    %154 = vmatpush2.msra.mxu0 0.0
    %155 = vmatprep.subr.mxu0 0.0
    %156 = vmatpush2.msra.mxu0 0.0
    %157 = vmatprep.subr.mxu0 0.0
    %158 = vmatpush2.msra.mxu0 0.0
    %159 = vmatprep.subr.mxu0 0.0
    %160 = vmatpush2.msra.mxu0 0.0
    %161 = vmatprep.mubr.f32.mxu0 0.0
    %162 = vmatmul.mubr.f32.gmra.mxu0 %v86
    %v163 = vpop.f32.mrf.mxu0
    %v164 = vadd.f32 %v67, %v163
    %v165 = vpop.f32.mrf.mxu0
    %166 = vmatprep.mubr.f32.mxu0 0.0
    %167 = vmatmul.mubr.f32.gmra.mxu0 %v89
    %v168 = vpop.f32.mrf.mxu0
    %v169 = vadd.f32 %v72, %v168
    %v170 = vpop.f32.mrf.mxu0
    %171 = vmatprep.mubr.f32.mxu0 0.0
    %172 = vmatmul.mubr.f32.gmra.mxu0 %v92
    %v173 = vpop.f32.mrf.mxu0
    %v174 = vadd.f32 %v77, %v173
    %v175 = vpop.f32.mrf.mxu0
    %176 = vmatprep.mubr.f32.mxu0 0.0
    %177 = vmatmul.mubr.f32.gmra.mxu0 %v95
    %v178 = vpop.f32.mrf.mxu0
    %v179 = vadd.f32 %v82, %v178
    %v180 = vpop.f32.mrf.mxu0
    %181 = vdwg.mxu0
    %v182 = vmax.f32 %v164, 0.0
    %v183 = vmax.f32 %v169, 0.0
    %v184 = vmax.f32 %v174, 0.0
    %v185 = vmax.f32 %v179, 0.0
    %186 = vset.pattern.permute.xlu0 1
    %187 = vperm.xlu0 %186, %v60
    %v188 = vpop.permute.xlu0 %187
    %190 = vset.pattern.permute.xlu0 1
    %191 = vperm.xlu0 %190, %v61
    %v192 = vpop.permute.xlu0 %191
    %194 = vset.pattern.permute.xlu0 1
    %195 = vperm.xlu0 %194, %v62
    %v196 = vpop.permute.xlu0 %195
    %198 = vset.pattern.permute.xlu0 1
    %199 = vperm.xlu0 %198, %v63
    %v200 = vpop.permute.xlu0 %199
    %vm202 = vcmask 261120
    %v204 = vsel %vm202, %v52, 0
    %v207 = vsel %vm202, %v53, 0
    %v210 = vsel %vm202, %v54, 0
    %v213 = vsel %vm202, %v55, 0
    %215 = vmatprep.subr.mxu0 0.0
    %216 = vmatpush1.msra.mxu0 0.0
    %217 = vmatprep.subr.mxu0 0.0
    %218 = vmatpush1.msra.mxu0 0.0
    %219 = vmatprep.subr.mxu0 0.0
    %220 = vmatpush1.msra.mxu0 0.0
    %221 = vmatprep.subr.mxu0 0.0
    %222 = vmatpush1.msra.mxu0 0.0
    %223 = vmatprep.subr.mxu0 0.0
    %224 = vmatpush1.msra.mxu0 0.0
    %225 = vmatprep.subr.mxu0 0.0
    %226 = vmatpush1.msra.mxu0 0.0
    %227 = vmatprep.subr.mxu0 0.0
    %228 = vmatpush1.msra.mxu0 0.0
    %229 = vmatprep.subr.mxu0 0.0
    %230 = vmatpush1.msra.mxu0 0.0
    %231 = vmatprep.subr.mxu0 0.0
    %232 = vmatpush1.msra.mxu0 0.0
    %233 = vmatprep.subr.mxu0 0.0
    %234 = vmatpush1.msra.mxu0 0.0
    %235 = vmatprep.subr.mxu0 0.0
    %236 = vmatpush1.msra.mxu0 0.0
    %237 = vmatprep.subr.mxu0 0.0
    %238 = vmatpush1.msra.mxu0 0.0
    %239 = vmatprep.subr.mxu0 0.0
    %240 = vmatpush1.msra.mxu0 %v185
    %241 = vmatprep.subr.mxu0 0.0
    %242 = vmatpush1.msra.mxu0 %v184
    %243 = vmatprep.subr.mxu0 0.0
    %244 = vmatpush1.msra.mxu0 %v183
    %245 = vmatprep.subr.mxu0 0.0
    %246 = vmatpush1.msra.mxu0 %v182
    %247 = vmatprep.subr.mxu0 0.0
    %248 = vmatpush2.msra.mxu0 0.0
    %249 = vmatprep.subr.mxu0 0.0
    %250 = vmatpush2.msra.mxu0 0.0
    %251 = vmatprep.subr.mxu0 0.0
    %252 = vmatpush2.msra.mxu0 0.0
    %253 = vmatprep.subr.mxu0 0.0
    %254 = vmatpush2.msra.mxu0 0.0
    %255 = vmatprep.subr.mxu0 0.0
    %256 = vmatpush2.msra.mxu0 0.0
    %257 = vmatprep.subr.mxu0 0.0
    %258 = vmatpush2.msra.mxu0 0.0
    %259 = vmatprep.subr.mxu0 0.0
    %260 = vmatpush2.msra.mxu0 0.0
    %261 = vmatprep.subr.mxu0 0.0
    %262 = vmatpush2.msra.mxu0 0.0
    %263 = vmatprep.subr.mxu0 0.0
    %264 = vmatpush2.msra.mxu0 0.0
    %265 = vmatprep.subr.mxu0 0.0
    %266 = vmatpush2.msra.mxu0 0.0
    %267 = vmatprep.subr.mxu0 0.0
    %268 = vmatpush2.msra.mxu0 0.0
    %269 = vmatprep.subr.mxu0 0.0
    %270 = vmatpush2.msra.mxu0 0.0
    %271 = vmatprep.subr.mxu0 0.0
    %272 = vmatpush2.msra.mxu0 0.0
    %273 = vmatprep.subr.mxu0 0.0
    %274 = vmatpush2.msra.mxu0 0.0
    %275 = vmatprep.subr.mxu0 0.0
    %276 = vmatpush2.msra.mxu0 0.0
    %277 = vmatprep.subr.mxu0 0.0
    %278 = vmatpush2.msra.mxu0 0.0
    %279 = vmatprep.mubr.f32.mxu0 0.0
    %280 = vmatmul.mubr.f32.gmra.mxu0 %v204
    %v281 = vpop.f32.mrf.mxu0
    %v282 = vadd.f32 %v188, %v281
    %v283 = vpop.f32.mrf.mxu0
    %284 = vmatprep.mubr.f32.mxu0 0.0
    %285 = vmatmul.mubr.f32.gmra.mxu0 %v207
    %v286 = vpop.f32.mrf.mxu0
    %v287 = vadd.f32 %v192, %v286
    %v288 = vpop.f32.mrf.mxu0
    %289 = vmatprep.mubr.f32.mxu0 0.0
    %290 = vmatmul.mubr.f32.gmra.mxu0 %v210
    %v291 = vpop.f32.mrf.mxu0
    %v292 = vadd.f32 %v196, %v291
    %v293 = vpop.f32.mrf.mxu0
    %294 = vmatprep.mubr.f32.mxu0 0.0
    %295 = vmatmul.mubr.f32.gmra.mxu0 %v213
    %v296 = vpop.f32.mrf.mxu0
    %v297 = vadd.f32 %v200, %v296
    %v298 = vpop.f32.mrf.mxu0
    %299 = vdwg.mxu0
    %v300 = vmax.f32 %v282, 0.0
    %v301 = vmax.f32 %v287, 0.0
    %v302 = vmax.f32 %v292, 0.0
    %v303 = vmax.f32 %v297, 0.0
    %304 = vset.pattern.permute.xlu0 2
    %305 = vperm.xlu0 %304, %v60
    %v306 = vpop.permute.xlu0 %305
    %308 = vset.pattern.permute.xlu0 2
    %309 = vperm.xlu0 %308, %v61
    %v310 = vpop.permute.xlu0 %309
    %311 = vset.pattern.permute.xlu0 2
    %312 = vperm.xlu0 %311, %v62
    %v313 = vpop.permute.xlu0 %312
    %314 = vset.pattern.permute.xlu0 2
    %315 = vperm.xlu0 %314, %v63
    %v316 = vpop.permute.xlu0 %315
    %v318 = vsel %vm202, %v56, 0
    %v321 = vsel %vm202, %v57, 0
    %v324 = vsel %vm202, %v58, 0
    %v327 = vsel %vm202, %v59, 0
    %329 = vmatprep.subr.mxu0 0.0
    %330 = vmatpush1.msra.mxu0 0.0
    %331 = vmatprep.subr.mxu0 0.0
    %332 = vmatpush1.msra.mxu0 0.0
    %333 = vmatprep.subr.mxu0 0.0
    %334 = vmatpush1.msra.mxu0 0.0
    %335 = vmatprep.subr.mxu0 0.0
    %336 = vmatpush1.msra.mxu0 0.0
    %337 = vmatprep.subr.mxu0 0.0
    %338 = vmatpush1.msra.mxu0 0.0
    %339 = vmatprep.subr.mxu0 0.0
    %340 = vmatpush1.msra.mxu0 0.0
    %341 = vmatprep.subr.mxu0 0.0
    %342 = vmatpush1.msra.mxu0 0.0
    %343 = vmatprep.subr.mxu0 0.0
    %344 = vmatpush1.msra.mxu0 0.0
    %345 = vmatprep.subr.mxu0 0.0
    %346 = vmatpush1.msra.mxu0 0.0
    %347 = vmatprep.subr.mxu0 0.0
    %348 = vmatpush1.msra.mxu0 0.0
    %349 = vmatprep.subr.mxu0 0.0
    %350 = vmatpush1.msra.mxu0 0.0
    %351 = vmatprep.subr.mxu0 0.0
    %352 = vmatpush1.msra.mxu0 0.0
    %353 = vmatprep.subr.mxu0 0.0
    %354 = vmatpush1.msra.mxu0 %v303
    %355 = vmatprep.subr.mxu0 0.0
    %356 = vmatpush1.msra.mxu0 %v302
    %357 = vmatprep.subr.mxu0 0.0
    %358 = vmatpush1.msra.mxu0 %v301
    %359 = vmatprep.subr.mxu0 0.0
    %360 = vmatpush1.msra.mxu0 %v300
    %361 = vmatprep.subr.mxu0 0.0
    %362 = vmatpush2.msra.mxu0 0.0
    %363 = vmatprep.subr.mxu0 0.0
    %364 = vmatpush2.msra.mxu0 0.0
    %365 = vmatprep.subr.mxu0 0.0
    %366 = vmatpush2.msra.mxu0 0.0
    %367 = vmatprep.subr.mxu0 0.0
    %368 = vmatpush2.msra.mxu0 0.0
    %369 = vmatprep.subr.mxu0 0.0
    %370 = vmatpush2.msra.mxu0 0.0
    %371 = vmatprep.subr.mxu0 0.0
    %372 = vmatpush2.msra.mxu0 0.0
    %373 = vmatprep.subr.mxu0 0.0
    %374 = vmatpush2.msra.mxu0 0.0
    %375 = vmatprep.subr.mxu0 0.0
    %376 = vmatpush2.msra.mxu0 0.0
    %377 = vmatprep.subr.mxu0 0.0
    %378 = vmatpush2.msra.mxu0 0.0
    %379 = vmatprep.subr.mxu0 0.0
    %380 = vmatpush2.msra.mxu0 0.0
    %381 = vmatprep.subr.mxu0 0.0
    %382 = vmatpush2.msra.mxu0 0.0
    %383 = vmatprep.subr.mxu0 0.0
    %384 = vmatpush2.msra.mxu0 0.0
    %385 = vmatprep.subr.mxu0 0.0
    %386 = vmatpush2.msra.mxu0 0.0
    %387 = vmatprep.subr.mxu0 0.0
    %388 = vmatpush2.msra.mxu0 0.0
    %389 = vmatprep.subr.mxu0 0.0
    %390 = vmatpush2.msra.mxu0 0.0
    %391 = vmatprep.subr.mxu0 0.0
    %392 = vmatpush2.msra.mxu0 0.0
    %393 = vmatprep.mubr.f32.mxu0 0.0
    %394 = vmatmul.mubr.f32.gmra.mxu0 %v318
    %v395 = vpop.f32.mrf.mxu0
    %v396 = vadd.f32 %v306, %v395
    %v397 = vpop.f32.mrf.mxu0
    %398 = vmatprep.mubr.f32.mxu0 0.0
    %399 = vmatmul.mubr.f32.gmra.mxu0 %v321
    %v400 = vpop.f32.mrf.mxu0
    %v401 = vpop.f32.mrf.mxu0
    %402 = vmatprep.mubr.f32.mxu0 0.0
    %403 = vmatmul.mubr.f32.gmra.mxu0 %v324
    %v404 = vpop.f32.mrf.mxu0
    %v405 = vpop.f32.mrf.mxu0
    %406 = vmatprep.mubr.f32.mxu0 0.0
    %407 = vmatmul.mubr.f32.gmra.mxu0 %v327
    %v408 = vpop.f32.mrf.mxu0
    %v409 = vpop.f32.mrf.mxu0
    %410 = vdwg.mxu0
    %411 = vst [vmem:[#allocation7] sm:$0x7] %v396
    // Predicated region
    $region18: #{tpu_custom_call.1} parent=1 // pred_check
      _
    $region19: #{tpu_custom_call.1} parent=1 // pred_check_branch
      %413 = sbr.rel (0) target = $region21
    $region20: #{tpu_custom_call.1} parent=1 // pred_region
      %s415 = ssub.s32 64, 64
      %416 = vsyncadd [#allocation4], %s415
      %s418 = sshll.u32 [#allocation7], 4
      %s419 = int_to_ptr.vmem [resolvable:$true] %s418
      %421 = dma.vmem_to_hbm [thread:$0]  %s419, 64, %s2, [#allocation4]
    $region21: #{tpu_custom_call.1} parent=1 // pred_fallthru
      _
    // Predicated region
    $region22: #{tpu_custom_call.1} parent=1 // pred_check
      _
    $region23: #{tpu_custom_call.1} parent=1 // pred_check_branch
      %423 = sbr.rel (0) target = $region25
    $region24: #{tpu_custom_call.1} parent=1 // pred_region
      %424 = dma.done [#allocation4], 64
    $region25: #{tpu_custom_call.1} parent=1 // pred_fallthru
      _
    %425 = vsyncpa [#allocation3], 1
    %426 = vsyncpa [#allocation6], 1
    %427 = vsyncpa [#allocation4], 1

</llo_original>
